<compile_context>
chip_gen: v5e
topology: v5e:2x2
jax: 0.10.0
libtpu: 0.0.40
codegen_flags: <defaults>
</compile_context>

<pallas_src>
import functools

import numpy as np
import jax
import jax.numpy as jnp
from jax import lax
from jax.experimental import pallas as pl
from jax.experimental.pallas import tpu as pltpu


def _neg_kernel(q_ref, kt_ref, tc_ref, tr_ref, neg_ref, *,
                inv_temp, drop_fn, batch_size, slab):
    """One grid step: rows [i*tm, (i+1)*tm) of the compacted `neg` matrix."""
    tm = q_ref.shape[0]
    two_b = kt_ref.shape[1]
    w = two_b - 2                                  # compacted output width

    # (tm, D) @ (D, 2B) on the MXU: bf16 operands, f32 accumulation.  Keys were
    # transposed once in the wrapper, so this is a plain K-major contraction.
    sim = jnp.dot(q_ref[...], kt_ref[...], preferred_element_type=jnp.float32)
    sim = sim * inv_temp                           # fold 1/temperature into one multiply

    if drop_fn:
        # get_target_mask: (t_i == t_j) & (t_i != -1); applied BEFORE the exp as -inf
        # so exp(-inf) = 0 reproduces masked_fill(0.).
        tc = tc_ref[...]                           # (tm, 1) int32
        tr = tr_ref[...]                           # (1, 2B) int32
        fn_mask = (tc == tr) & (tc != -1)
        sim = jnp.where(fn_mask, -jnp.inf, sim)

    e = jnp.exp(sim)                               # (tm, 2B) f32

    # Fused masked_select(get_negative_mask(B)).view(2B, -1):
    # global row r drops columns p1 = r % B and p1 + B, i.e.
    #   out[r, c] = e[r, c + shift],  shift = (c >= p1) + (c >= p1 + B - 1) in {0,1,2}.
    # Per-ROW index math: one (tm,1) modulo instead of a (tm,2B) modulo + full-tile iotas.
    row0 = pl.program_id(0) * tm
    r = row0 + lax.broadcasted_iota(jnp.int32, (tm, 1), 0)       # (tm, 1)
    p1 = r % batch_size                                          # (tm, 1)
    p2 = p1 + (batch_size - 1)                                   # (tm, 1)

    # Column-slab loop (static, unrolled at trace time): bounds live temporaries to
    # ~3 slab-sized tiles instead of 3 full-width (tm, 2B) tiles.
    for s0 in range(0, w, slab):
        sw = min(slab, w - s0)
        c = s0 + lax.broadcasted_iota(jnp.int32, (1, sw), 1)     # (1, sw)
        e0 = e[:, s0:s0 + sw]                                    # shift 0
        e1 = e[:, s0 + 1:s0 + 1 + sw]                            # shift 1
        e2 = e[:, s0 + 2:s0 + 2 + sw]                            # shift 2
        neg_ref[:, s0:s0 + sw] = jnp.where(c < p1, e0,
                                           jnp.where(c < p2, e1, e2))


def _constant_key_spec(d_pad, two_b):
    # The key block's index_map never changes, so the second pipeline buffer is dead
    # weight -- single-buffer it to halve its VMEM footprint.  Fall back to the default
    # (double-buffered) spec on JAX versions without the pipeline_mode kwarg.
    try:
        return pl.BlockSpec((d_pad, two_b), lambda i: (0, 0),
                            pipeline_mode=pl.Buffered(1))
    except TypeError:
        return pl.BlockSpec((d_pad, two_b), lambda i: (0, 0))


def contrastive_loss_forward(out_1, out_2, target, *, temperature=0.5,
                             drop_fn=True, block_rows=256, slab_cols=512,
                             compute_dtype=jnp.bfloat16):
    """Returns (pos, neg) exactly like ContrastiveLossBase.forward.

    pos: (2B,) float32
    neg: (2B, 2B-2) float32
    """
    B, D = out_1.shape
    two_b = 2 * B
    w = two_b - 2
    inv_temp = 1.0 / float(temperature)

    o1 = out_1.astype(compute_dtype)
    o2 = out_2.astype(compute_dtype)
    out = jnp.concatenate([o1, o2], axis=0)                       # (2B, D)

    # Pad the contraction dim to a lane multiple once (zeros don't change the dots).
    d_pad = ((D + 127) // 128) * 128
    if d_pad != D:
        out = jnp.pad(out, ((0, 0), (0, d_pad - D)))

    # One-time wrapper transpose: K-major RHS for the MXU, fetched once by the kernel.
    keys_t = out.T                                                # (d_pad, 2B)

    # Row tile: multiple of 8, capped at B so the grid always has >= 2 steps (megacore
    # on v7x) and never the pathological full-extent tm = 2B tile.  Rows are padded to
    # a multiple of tm; padded rows compute on zeros / target -1 and are sliced off.
    tm = max(8, (min(int(block_rows), B) // 8) * 8)
    rows_pad = ((two_b + tm - 1) // tm) * tm
    grid = (rows_pad // tm,)

    tgt2 = jnp.concatenate([target, target], axis=0).astype(jnp.int32)   # (2B,)
    q = out
    tgt_col = tgt2
    if rows_pad != two_b:
        q = jnp.pad(q, ((0, rows_pad - two_b), (0, 0)))
        tgt_col = jnp.pad(tgt_col, (0, rows_pad - two_b), constant_values=-1)
    tgt_col = tgt_col.reshape(rows_pad, 1)
    tgt_row = tgt2.reshape(1, two_b)

    slab = max(1, min(int(slab_cols), w))

    kernel = functools.partial(
        _neg_kernel,
        inv_temp=inv_temp,
        drop_fn=bool(drop_fn),
        batch_size=int(B),
        slab=slab,
    )

    # VMEM budget derived from the actual blocks (keys single-buffered, rows/output
    # double-buffered, plus full-width f32 temporaries), capped for v7x's 64 MiB.
    est = (d_pad * two_b * 2            # keys (bf16, single buffer)
           + 2 * tm * d_pad * 2         # query row tiles (bf16, double buffer)
           + 2 * tm * w * 4             # output tiles (f32, double buffer)
           + 4 * tm * two_b * 4)        # in-kernel f32 temporaries (sim/e/slabs)
    vmem_limit = int(min(64 * 1024 * 1024, max(32 * 1024 * 1024, 2 * est)))

    neg = pl.pallas_call(
        kernel,
        out_shape=jax.ShapeDtypeStruct((rows_pad, w), jnp.float32),
        grid_spec=pltpu.PrefetchScalarGridSpec(
            num_scalar_prefetch=0,
            grid=grid,
            in_specs=[
                pl.BlockSpec((tm, d_pad), lambda i: (i, 0)),      # query rows (tiled)
                _constant_key_spec(d_pad, two_b),                 # all keys (fetched once)
                pl.BlockSpec((tm, 1), lambda i: (i, 0)),          # targets, column form
                pl.BlockSpec((1, two_b), lambda i: (0, 0)),       # targets, row form
            ],
            out_specs=pl.BlockSpec((tm, w), lambda i: (i, 0)),
        ),
        compiler_params=pltpu.CompilerParams(
            dimension_semantics=("parallel",),      # megacore-shardable on v7x
            vmem_limit_bytes=vmem_limit,
        ),
    )(q, keys_t, tgt_col, tgt_row)

    if rows_pad != two_b:
        neg = neg[:two_b]

    # pos = exp(sum(out_1 * out_2, -1) / T), duplicated for both views.
    # Trivial BxD elementwise + reduce -> plain JAX (hoisted out of the kernel).
    p = jnp.exp(jnp.sum(o1.astype(jnp.float32) * o2.astype(jnp.float32), axis=-1)
                * inv_temp)
    pos = jnp.concatenate([p, p], axis=0)
    return pos, neg
    # TODO(synk): if the downstream loss only needs neg.sum(-1) (NT-Xent denominator),
    # add a fused-reduction variant that outputs (2B,1) and skips the compaction/writeback.


def _reference(out_1, out_2, target, temperature, drop_fn):
    """Pure numpy reference mirroring the PyTorch code (f64, same bf16 inputs)."""
    o1 = np.asarray(out_1.astype(jnp.float32), dtype=np.float64)
    o2 = np.asarray(out_2.astype(jnp.float32), dtype=np.float64)
    t = np.asarray(target, dtype=np.int64)
    B = o1.shape[0]
    out = np.concatenate([o1, o2], axis=0)
    neg = np.exp(out @ out.T / temperature)
    if drop_fn:
        tt = np.concatenate([t, t]).reshape(-1, 1)
        mask = (tt == tt.T) & (tt != -1)
        neg = np.where(mask, 0.0, neg)
    nm = np.ones((2 * B, 2 * B), dtype=bool)
    for i in range(B):
        nm[i, i] = nm[i, i + B] = False
        nm[i + B, i] = nm[i + B, i + B] = False
    neg = neg[nm].reshape(2 * B, -1)
    pos = np.exp(np.sum(o1 * o2, -1) / temperature)
    pos = np.concatenate([pos, pos], 0)
    return pos, neg


if __name__ == "__main__":
    key = jax.random.PRNGKey(0)
    temperature = 0.5

    # (B, D, drop_fn, block_rows, slab_cols):
    #   cfg 0: multi-step grid + multi-slab compaction
    #   cfg 1: single slab, drop_fn disabled
    #   cfg 2: row padding (2B % tm != 0) + contraction-dim padding (D % 128 != 0)
    configs = [
        (8, 128, True, 8, 8),
        (8, 128, False, 256, 512),
        (6, 96, True, 64, 512),
    ]

    for B, D, drop_fn, block_rows, slab_cols in configs:
        key, k1, k2 = jax.random.split(key, 3)
        x1 = jax.random.normal(k1, (B, D), dtype=jnp.float32)
        x2 = jax.random.normal(k2, (B, D), dtype=jnp.float32)
        # L2-normalize (standard for SimCLR embeddings) and cast to the bf16 compute
        # dtype so the kernel and the numpy reference see identical inputs.
        out_1 = (x1 / jnp.linalg.norm(x1, axis=-1, keepdims=True)).astype(jnp.bfloat16)
        out_2 = (x2 / jnp.linalg.norm(x2, axis=-1, keepdims=True)).astype(jnp.bfloat16)
        # Targets with duplicate classes and "ignore" (-1) labels.
        target = jnp.array(
            [(-1 if i % 4 == 3 else i % 3) for i in range(B)], dtype=jnp.int32)

        pos, neg = contrastive_loss_forward(out_1, out_2, target,
                                            temperature=temperature,
                                            drop_fn=drop_fn,
                                            block_rows=block_rows,
                                            slab_cols=slab_cols)
        jax.block_until_ready((pos, neg))

        pos_ref, neg_ref = _reference(out_1, out_2, target, temperature, drop_fn)
        assert pos.shape == (2 * B,) and neg.shape == (2 * B, 2 * B - 2)
        np.testing.assert_allclose(np.asarray(pos), pos_ref, rtol=2e-3, atol=1e-6)
        np.testing.assert_allclose(np.asarray(neg), neg_ref, rtol=2e-3, atol=1e-6)

    print("KERNEL_OK")
</pallas_src>

<mosaic_0001>
module attributes {stable_mosaic.version = 11 : i64} {
  func.func @_neg_kernel(%arg0: i32, %arg1: memref<8x128xbf16, #tpu.memory_space<vmem>>, %arg2: memref<128x16xbf16, #tpu.memory_space<vmem>>, %arg3: memref<8x1xi32, #tpu.memory_space<vmem>>, %arg4: memref<1x16xi32, #tpu.memory_space<vmem>>, %arg5: memref<8x14xf32, #tpu.memory_space<vmem>>) attributes {dimension_semantics = [#tpu.dimension_semantics<parallel>], iteration_bounds = array<i64: 2>, scalar_prefetch = 0 : i64, scratch_operands = 0 : i64, tpu.core_type = #tpu.core_type<tc>, window_params = [{transform_indices = @transform_0, window_bounds = array<i64: 8, 128>}, {pipeline_mode = #tpu.pipeline_mode<synchronous>, transform_indices = @transform_1, window_bounds = array<i64: 128, 16>}, {transform_indices = @transform_2, window_bounds = array<i64: 8, 1>}, {pipeline_mode = #tpu.pipeline_mode<synchronous>, transform_indices = @transform_3, window_bounds = array<i64: 1, 16>}, {transform_indices = @transform_4, window_bounds = array<i64: 8, 14>}]} {
    %c0 = arith.constant 0 : index
    %c0_0 = arith.constant 0 : index
    %0 = vector.load %arg1[%c0, %c0_0] : memref<8x128xbf16, #tpu.memory_space<vmem>>, vector<8x128xbf16>
    %c0_1 = arith.constant 0 : index
    %c0_2 = arith.constant 0 : index
    %1 = vector.load %arg2[%c0_1, %c0_2] : memref<128x16xbf16, #tpu.memory_space<vmem>>, vector<128x16xbf16>
    %cst = arith.constant dense<0.000000e+00> : vector<8x16xf32>
    %2 = tpu.matmul %0, %1, %cst {dimension_numbers = #tpu.dot_dimension_numbers<[1], [0], [0], [1], [0, 0, 1, 1], [], []>} : vector<8x128xbf16>, vector<128x16xbf16>, vector<8x16xf32> -> vector<8x16xf32>
    %cst_3 = arith.constant 2.000000e+00 : f32
    %3 = vector.broadcast %cst_3 : f32 to vector<8x16xf32>
    %4 = arith.mulf %2, %3 : vector<8x16xf32>
    %c0_4 = arith.constant 0 : index
    %c0_5 = arith.constant 0 : index
    %5 = vector.load %arg3[%c0_4, %c0_5] : memref<8x1xi32, #tpu.memory_space<vmem>>, vector<8x1xi32>
    %c0_6 = arith.constant 0 : index
    %c0_7 = arith.constant 0 : index
    %6 = vector.load %arg4[%c0_6, %c0_7] : memref<1x16xi32, #tpu.memory_space<vmem>>, vector<1x16xi32>
    %7 = vector.broadcast %5 : vector<8x1xi32> to vector<8x16xi32>
    %8 = vector.broadcast %6 : vector<1x16xi32> to vector<8x16xi32>
    %9 = arith.cmpi eq, %7, %8 : vector<8x16xi32>
    %c-1_i32 = arith.constant -1 : i32
    %10 = vector.broadcast %c-1_i32 : i32 to vector<8x1xi32>
    %11 = arith.cmpi ne, %5, %10 : vector<8x1xi32>
    %12 = vector.broadcast %11 : vector<8x1xi1> to vector<8x16xi1>
    %13 = arith.andi %9, %12 : vector<8x16xi1>
    %cst_8 = arith.constant 0xFF800000 : f32
    %14 = vector.broadcast %cst_8 : f32 to vector<8x16xf32>
    %15 = arith.select %13, %14, %4 : vector<8x16xi1>, vector<8x16xf32>
    %16 = math.exp %15 : vector<8x16xf32>
    %c8_i32 = arith.constant 8 : i32
    %17 = arith.muli %arg0, %c8_i32 : i32
    %18 = tpu.iota {dimensions = array<i32: 0>} : vector<8x1xi32>
    %19 = vector.broadcast %17 : i32 to vector<8x1xi32>
    %20 = arith.addi %19, %18 : vector<8x1xi32>
    %c8_i32_9 = arith.constant 8 : i32
    %c0_i32 = arith.constant 0 : i32
    %21 = arith.cmpi eq, %c8_i32_9, %c0_i32 : i32
    %c1_i32 = arith.constant 1 : i32
    %22 = arith.select %21, %c1_i32, %c8_i32_9 : i32
    %23 = vector.broadcast %22 : i32 to vector<8x1xi32>
    %24 = arith.remsi %20, %23 : vector<8x1xi32>
    %c0_i32_10 = arith.constant 0 : i32
    %25 = vector.broadcast %c0_i32_10 : i32 to vector<8x1xi32>
    %26 = arith.cmpi ne, %24, %25 : vector<8x1xi32>
    %c0_i32_11 = arith.constant 0 : i32
    %27 = vector.broadcast %c0_i32_11 : i32 to vector<8x1xi32>
    %28 = arith.cmpi slt, %24, %27 : vector<8x1xi32>
    %c0_i32_12 = arith.constant 0 : i32
    %29 = arith.cmpi slt, %22, %c0_i32_12 : i32
    %30 = vector.broadcast %29 : i1 to vector<8x1xi1>
    %31 = vector.broadcast %30 : vector<8x1xi1> to vector<8x1xi1>
    %32 = arith.xori %28, %31 : vector<8x1xi1>
    %33 = arith.andi %32, %26 : vector<8x1xi1>
    %34 = vector.broadcast %22 : i32 to vector<8x1xi32>
    %35 = arith.addi %24, %34 : vector<8x1xi32>
    %36 = arith.select %33, %35, %24 : vector<8x1xi1>, vector<8x1xi32>
    %c7_i32 = arith.constant 7 : i32
    %37 = vector.broadcast %c7_i32 : i32 to vector<8x1xi32>
    %38 = arith.addi %36, %37 : vector<8x1xi32>
    %39 = tpu.iota {dimensions = array<i32: 1>} : vector<1x8xi32>
    %c0_i32_13 = arith.constant 0 : i32
    %40 = vector.broadcast %c0_i32_13 : i32 to vector<1x8xi32>
    %41 = arith.addi %40, %39 : vector<1x8xi32>
    %42 = vector.extract_strided_slice %16 {offsets = [0, 0], sizes = [8, 8], strides = [1, 1]} : vector<8x16xf32> to vector<8x8xf32>
    %43 = vector.extract_strided_slice %16 {offsets = [0, 1], sizes = [8, 8], strides = [1, 1]} : vector<8x16xf32> to vector<8x8xf32>
    %44 = vector.extract_strided_slice %16 {offsets = [0, 2], sizes = [8, 8], strides = [1, 1]} : vector<8x16xf32> to vector<8x8xf32>
    %45 = vector.broadcast %41 : vector<1x8xi32> to vector<8x8xi32>
    %46 = vector.broadcast %36 : vector<8x1xi32> to vector<8x8xi32>
    %47 = arith.cmpi slt, %45, %46 : vector<8x8xi32>
    %48 = vector.broadcast %41 : vector<1x8xi32> to vector<8x8xi32>
    %49 = vector.broadcast %38 : vector<8x1xi32> to vector<8x8xi32>
    %50 = arith.cmpi slt, %48, %49 : vector<8x8xi32>
    %51 = arith.select %50, %43, %44 : vector<8x8xi1>, vector<8x8xf32>
    %52 = arith.select %47, %42, %51 : vector<8x8xi1>, vector<8x8xf32>
    %c0_14 = arith.constant 0 : index
    %c0_15 = arith.constant 0 : index
    %53 = vector.load %arg5[%c0_14, %c0_15] : memref<8x14xf32, #tpu.memory_space<vmem>>, vector<8x8xf32>
    tpu.vector_store %arg5[%c0_14, %c0_15], %52 {strides = array<i32>} : memref<8x14xf32, #tpu.memory_space<vmem>>, vector<8x8xf32>,
    %54 = tpu.iota {dimensions = array<i32: 1>} : vector<1x6xi32>
    %c8_i32_16 = arith.constant 8 : i32
    %55 = vector.broadcast %c8_i32_16 : i32 to vector<1x6xi32>
    %56 = arith.addi %55, %54 : vector<1x6xi32>
    %57 = vector.extract_strided_slice %16 {offsets = [0, 8], sizes = [8, 6], strides = [1, 1]} : vector<8x16xf32> to vector<8x6xf32>
    %58 = vector.extract_strided_slice %16 {offsets = [0, 9], sizes = [8, 6], strides = [1, 1]} : vector<8x16xf32> to vector<8x6xf32>
    %59 = vector.extract_strided_slice %16 {offsets = [0, 10], sizes = [8, 6], strides = [1, 1]} : vector<8x16xf32> to vector<8x6xf32>
    %60 = vector.broadcast %56 : vector<1x6xi32> to vector<8x6xi32>
    %61 = vector.broadcast %36 : vector<8x1xi32> to vector<8x6xi32>
    %62 = arith.cmpi slt, %60, %61 : vector<8x6xi32>
    %63 = vector.broadcast %56 : vector<1x6xi32> to vector<8x6xi32>
    %64 = vector.broadcast %38 : vector<8x1xi32> to vector<8x6xi32>
    %65 = arith.cmpi slt, %63, %64 : vector<8x6xi32>
    %66 = arith.select %65, %58, %59 : vector<8x6xi1>, vector<8x6xf32>
    %67 = arith.select %62, %57, %66 : vector<8x6xi1>, vector<8x6xf32>
    %c0_17 = arith.constant 0 : index
    %c8 = arith.constant 8 : index
    %68 = vector.load %arg5[%c0_17, %c8] : memref<8x14xf32, #tpu.memory_space<vmem>>, vector<8x6xf32>
    tpu.vector_store %arg5[%c0_17, %c8], %67 {strides = array<i32>} : memref<8x14xf32, #tpu.memory_space<vmem>>, vector<8x6xf32>,
    return
  }
  func.func @transform_0(%arg0: i32) -> (i32, i32) {
    %c0_i32 = arith.constant 0 : i32
    %c0_i32_0 = arith.constant 0 : i32
    return %arg0, %c0_i32 : i32, i32
  }
  func.func @transform_1(%arg0: i32) -> (i32, i32) {
    %c0_i32 = arith.constant 0 : i32
    %c0_i32_0 = arith.constant 0 : i32
    %c0_i32_1 = arith.constant 0 : i32
    return %c0_i32, %c0_i32_0 : i32, i32
  }
  func.func @transform_2(%arg0: i32) -> (i32, i32) {
    %c0_i32 = arith.constant 0 : i32
    %c0_i32_0 = arith.constant 0 : i32
    return %arg0, %c0_i32 : i32, i32
  }
  func.func @transform_3(%arg0: i32) -> (i32, i32) {
    %c0_i32 = arith.constant 0 : i32
    %c0_i32_0 = arith.constant 0 : i32
    %c0_i32_1 = arith.constant 0 : i32
    return %c0_i32, %c0_i32_0 : i32, i32
  }
  func.func @transform_4(%arg0: i32) -> (i32, i32) {
    %c0_i32 = arith.constant 0 : i32
    %c0_i32_0 = arith.constant 0 : i32
    return %arg0, %c0_i32 : i32, i32
  }
}

</mosaic_0001>

<llo_original>
// kernel: tpu_custom_call.1
$region0: #{tpu_custom_call.1}
  #allocation0 [shape = 'u32[]', space=smem, size = 0x4, offset = 0x4, fixed_abs, tag = 'smem constant byte address 0x4 - core index']
  #allocation1 [shape = 'u32[72,128]{1,0:T(1,128)}', space=vmem, size = 0x9000, scoped, tag = 'internal scratch']
  %s0 = inlined_call_operand.vmem [shape: bf16[16,128], index: 0, kind: input, shape index: {}]
  %s1 = inlined_call_operand.vmem [shape: bf16[128,16], index: 1, kind: input, shape index: {}]
  %s2 = inlined_call_operand.vmem [shape: s32[16,1], index: 2, kind: input, shape index: {}]
  %s3 = inlined_call_operand.vmem [shape: s32[1,16], index: 3, kind: input, shape index: {}]
  %s4 = inlined_call_operand.hbm [shape: f32[16,14], index: 4, kind: output, shape index: {}]
  %s5 = sld [smem:[#allocation0]]
  $region49: #{tpu_custom_call.1} parent=0
    _
  %s7 = ssub.s32 1, %s5
  %s8 = scalar_select 0, %s7, %s5
  $region1: #{tpu_custom_call.1} parent=0
    #allocation2 [shape = 'u8[8192]{0}', space=vmem, size = 0x2000, scoped, tag = 'output window, operand 0']
    #allocation3 [shape = 's32[2]{0}', space=sflag, size = 0x8, scoped, tag = 'scoped memory for tpu_custom_call.1']
    %9 = vsyncpa [#allocation3], 0
    %s10 = scalar_lea.sflag [#allocation3], 1
    %11 = vsyncpa %s10, 0
    loop: start=0, step=1, limit=4
    $region2: #{tpu_custom_call.1} parent=1 // loop_pre_header
      _
    $region3: #{tpu_custom_call.1} parent=1 // loop_header
      %s13 = sphi 0, %s17
      %p14 = scmp.ge.s32.totalorder %s13, 4
      %s23 = sphi 0, %s25
      %s26 = sphi 0, %s23
      %s27 = sphi 0, %s26
      %s43 = sphi 0, %s27
      %s47 = sphi 0, %s47
      %s49 = sphi 0, %s47
      %s50 = sphi 0, %s49
      %s64 = sphi 0, %s50
      %s70 = sphi 0, %s72
      %s73 = sphi 0, %s70
      %s74 = sphi 0, %s73
      %s90 = sphi 0, %s74
      %s94 = sphi 0, %s94
      %s96 = sphi 0, %s94
      %s97 = sphi 0, %s96
      %s111 = sphi 0, %s97
      %s117 = sphi 0, %s119
      %s120 = sphi 0, %s117
      %s121 = sphi 0, %s120
      %s137 = sphi 0, %s121
    $region4: #{tpu_custom_call.1} parent=1 // loop_header_branch
      %16 = sbr.rel (%p14) target = $region8
    $region5: #{tpu_custom_call.1} parent=1 // loop_body
      %s18 = ssub.s32 %s13, 1
      %s19 = ssub.s32 %s13, 2
      %s20 = sadd.s32 %s13, 1
      %s21 = ssub.s32 %s13, %s20
      %p22 = scmp.eq.s32.totalorder %s21, 0
      %s24 = sadd.s32 %s23, 1
      %s25 = scalar_select %p22, %s23, %s24
      %p28 = pneg %p22
      %p29 = scmp.eq.s32.totalorder %s13, 1
      %p30 = por %p28, %p29
      %p31 = scmp.ne.s32.totalorder %s23, %s26
      %p32 = scmp.eq.s32.totalorder %s13, 0
      %p33 = por %p31, %p32
      %p34 = scmp.ne.s32.totalorder %s23, %s26
      %p35 = scmp.eq.s32.totalorder %s18, 1
      %p36 = por %p34, %p35
      %p37 = scmp.ne.s32.totalorder %s26, %s27
      %p38 = scmp.eq.s32.totalorder %s18, 0
      %p39 = por %p37, %p38
      %p40 = scmp.ne.s32.totalorder %s26, %s27
      %p41 = scmp.eq.s32.totalorder %s19, 1
      %p42 = por %p40, %p41
      %p44 = scmp.ne.s32.totalorder %s27, %s43
      %p45 = scmp.eq.s32.totalorder %s19, 0
      %p46 = por %p44, %p45
      %s48 = sadd.s32 %s47, 1
      %p51 = scmp.eq.s32.totalorder %s13, 1
      %p52 = scmp.ne.s32.totalorder %s47, %s49
      %p53 = scmp.eq.s32.totalorder %s13, 0
      %p54 = por %p52, %p53
      %p55 = scmp.ne.s32.totalorder %s47, %s49
      %p56 = scmp.eq.s32.totalorder %s18, 1
      %p57 = por %p55, %p56
      %p58 = scmp.ne.s32.totalorder %s49, %s50
      %p59 = scmp.eq.s32.totalorder %s18, 0
      %p60 = por %p58, %p59
      %p61 = scmp.ne.s32.totalorder %s49, %s50
      %p62 = scmp.eq.s32.totalorder %s19, 1
      %p63 = por %p61, %p62
      %p65 = scmp.ne.s32.totalorder %s50, %s64
      %p66 = scmp.eq.s32.totalorder %s19, 0
      %p67 = por %p65, %p66
      %s68 = ssub.s32 %s13, %s20
      %p69 = scmp.eq.s32.totalorder %s68, 0
      %s71 = sadd.s32 %s70, 1
      %s72 = scalar_select %p69, %s70, %s71
      %p75 = pneg %p69
      %p76 = scmp.eq.s32.totalorder %s13, 1
      %p77 = por %p75, %p76
      %p78 = scmp.ne.s32.totalorder %s70, %s73
      %p79 = scmp.eq.s32.totalorder %s13, 0
      %p80 = por %p78, %p79
      %p81 = scmp.ne.s32.totalorder %s70, %s73
      %p82 = scmp.eq.s32.totalorder %s18, 1
      %p83 = por %p81, %p82
      %p84 = scmp.ne.s32.totalorder %s73, %s74
      %p85 = scmp.eq.s32.totalorder %s18, 0
      %p86 = por %p84, %p85
      %p87 = scmp.ne.s32.totalorder %s73, %s74
      %p88 = scmp.eq.s32.totalorder %s19, 1
      %p89 = por %p87, %p88
      %p91 = scmp.ne.s32.totalorder %s74, %s90
      %p92 = scmp.eq.s32.totalorder %s19, 0
      %p93 = por %p91, %p92
      %s95 = sadd.s32 %s94, 1
      %p98 = scmp.eq.s32.totalorder %s13, 1
      %p99 = scmp.ne.s32.totalorder %s94, %s96
      %p100 = scmp.eq.s32.totalorder %s13, 0
      %p101 = por %p99, %p100
      %p102 = scmp.ne.s32.totalorder %s94, %s96
      %p103 = scmp.eq.s32.totalorder %s18, 1
      %p104 = por %p102, %p103
      %p105 = scmp.ne.s32.totalorder %s96, %s97
      %p106 = scmp.eq.s32.totalorder %s18, 0
      %p107 = por %p105, %p106
      %p108 = scmp.ne.s32.totalorder %s96, %s97
      %p109 = scmp.eq.s32.totalorder %s19, 1
      %p110 = por %p108, %p109
      %p112 = scmp.ne.s32.totalorder %s97, %s111
      %p113 = scmp.eq.s32.totalorder %s19, 0
      %p114 = por %p112, %p113
      %s115 = ssub.s32 %s13, %s20
      %p116 = scmp.eq.s32.totalorder %s115, 0
      %s118 = sadd.s32 %s117, 1
      %s119 = scalar_select %p116, %s117, %s118
      %p122 = pneg %p116
      %p123 = scmp.eq.s32.totalorder %s13, 1
      %p124 = por %p122, %p123
      %p125 = scmp.ne.s32.totalorder %s117, %s120
      %p126 = scmp.eq.s32.totalorder %s13, 0
      %p127 = por %p125, %p126
      %p128 = scmp.ne.s32.totalorder %s117, %s120
      %p129 = scmp.eq.s32.totalorder %s18, 1
      %p130 = por %p128, %p129
      %p131 = scmp.ne.s32.totalorder %s120, %s121
      %p132 = scmp.eq.s32.totalorder %s18, 0
      %p133 = por %p131, %p132
      %p134 = scmp.ne.s32.totalorder %s120, %s121
      %p135 = scmp.eq.s32.totalorder %s19, 1
      %p136 = por %p134, %p135
      %p138 = scmp.ne.s32.totalorder %s121, %s137
      %p139 = scmp.eq.s32.totalorder %s19, 0
      %p140 = por %p138, %p139
      %p141 = scmp.le.s32.totalorder 1, %s13
      %p142 = scmp.lt.s32.totalorder %s13, 3
      %p143 = pnand %p141, %p142
      %p144 = pneg %p143
      // Predicated region
      $region9: #{tpu_custom_call.1} parent=5 // pred_check
        _
      $region10: #{tpu_custom_call.1} parent=5 // pred_check_branch
        %146 = sbr.rel (%p143) target = $region12
      $region11: #{tpu_custom_call.1} parent=5 // pred_region
        %s147 = ssub.s32 %s13, 1
        // Predicated region
        $region13: #{tpu_custom_call.1} parent=11 // pred_check
          %p148 = pneg %p60
        $region14: #{tpu_custom_call.1} parent=11 // pred_check_branch
          %150 = sbr.rel (%p148) target = $region16
        $region15: #{tpu_custom_call.1} parent=11 // pred_region
          _
        $region16: #{tpu_custom_call.1} parent=11 // pred_fallthru
          _
        // Predicated region
        $region17: #{tpu_custom_call.1} parent=11 // pred_check
          %p151 = pneg %p107
        $region18: #{tpu_custom_call.1} parent=11 // pred_check_branch
          %153 = sbr.rel (%p151) target = $region20
        $region19: #{tpu_custom_call.1} parent=11 // pred_region
          _
        $region20: #{tpu_custom_call.1} parent=11 // pred_fallthru
          _
      $region12: #{tpu_custom_call.1} parent=5 // pred_fallthru
        _
      %p154 = scmp.lt.s32.totalorder %s13, 2
      // Predicated region
      $region21: #{tpu_custom_call.1} parent=5 // pred_check
        %p155 = pneg %p154
      $region22: #{tpu_custom_call.1} parent=5 // pred_check_branch
        %157 = sbr.rel (%p155) target = $region24
      $region23: #{tpu_custom_call.1} parent=5 // pred_region
        // Predicated region
        $region25: #{tpu_custom_call.1} parent=23 // pred_check
          %p158 = pneg %p33
        $region26: #{tpu_custom_call.1} parent=23 // pred_check_branch
          %160 = sbr.rel (%p158) target = $region28
        $region27: #{tpu_custom_call.1} parent=23 // pred_region
          %p161 = scmp.lt.s32.totalorder %s13, 1
          %s162 = scalar_select %p161, %s13, 1
          %s163 = smul.addr %s162, 4
          %s164 = scalar_lea.vmem %s0, %s163
        $region28: #{tpu_custom_call.1} parent=23 // pred_fallthru
          _
        // Predicated region
        $region29: #{tpu_custom_call.1} parent=23 // pred_check
          %p165 = pneg %p80
        $region30: #{tpu_custom_call.1} parent=23 // pred_check_branch
          %167 = sbr.rel (%p165) target = $region32
        $region31: #{tpu_custom_call.1} parent=23 // pred_region
          %p168 = scmp.lt.s32.totalorder %s13, 1
          %s169 = scalar_select %p168, %s13, 1
          %s170 = smul.addr %s169, 8
          %s171 = scalar_lea.vmem %s2, %s170
        $region32: #{tpu_custom_call.1} parent=23 // pred_fallthru
          _
      $region24: #{tpu_custom_call.1} parent=5 // pred_fallthru
        _
      %p172 = scmp.le.s32.totalorder 1, %s13
      %p173 = scmp.lt.s32.totalorder %s13, 3
      %p174 = pnand %p172, %p173
      %p175 = pneg %p174
      // Predicated region
      $region33: #{tpu_custom_call.1} parent=5 // pred_check
        _
      $region34: #{tpu_custom_call.1} parent=5 // pred_check_branch
        %177 = sbr.rel (%p174) target = $region36
      $region35: #{tpu_custom_call.1} parent=5 // pred_region
        %s178 = ssub.s32 %s13, 1
        %p179 = scmp.lt.s32.totalorder %s18, 1
        %s180 = scalar_select %p179, %s18, 1
        %s181 = smul.addr %s180, 4
        %s182 = scalar_lea.vmem %s0, %s181
        %p183 = pneg %p39
        %p184 = pneg %p36
        %p185 = pneg %p60
        %p186 = pneg %p57
        %p187 = scmp.lt.s32.totalorder %s18, 1
        %s188 = scalar_select %p187, %s18, 1
        %s189 = smul.addr %s188, 8
        %s190 = scalar_lea.vmem %s2, %s189
        %p191 = pneg %p86
        %p192 = pneg %p83
        %p193 = pneg %p107
        %p194 = pneg %p104
        %p195 = pneg %p133
        %p196 = pneg %p130
        %s197 = sand.u32 %s120, 1
        %s198 = scalar_lea.sflag [#allocation3], %s197
        %s199 = sand.u32 %s120, 1
        %s200 = smul.addr %s199, 8
        %s201 = scalar_lea.vmem [#allocation2], %s200
        %p202 = scmp.lt.s32.totalorder %s18, 1
        %s203 = scalar_select %p202, %s18, 1
        %s204 = smul.addr %s203, 4
        %s205 = scalar_lea.vmem %s0, %s204
        %p206 = scmp.lt.s32.totalorder %s18, 1
        %s207 = scalar_select %p206, %s18, 1
        %s208 = smul.addr %s207, 8
        %s209 = scalar_lea.vmem %s2, %s208
        %v210 = vld [vmem:[%s205] sm:$0xf]
        %v211 = vld [vmem:[%s1] sm:$0xf]
        %v212 = vld [vmem:[%s1 + $0x4] sm:$0xf]
        %v213 = vld [vmem:[%s1 + $0x8] sm:$0xf]
        %v214 = vld [vmem:[%s1 + $0xc] sm:$0xf]
        %v215 = vld [vmem:[%s1 + $0x10] sm:$0xf]
        %v216 = vld [vmem:[%s1 + $0x14] sm:$0xf]
        %v217 = vld [vmem:[%s1 + $0x18] sm:$0xf]
        %v218 = vld [vmem:[%s1 + $0x1c] sm:$0xf]
        %v219 = vld [vmem:[%s1 + $0x20] sm:$0xf]
        %v220 = vld [vmem:[%s1 + $0x24] sm:$0xf]
        %v221 = vld [vmem:[%s1 + $0x28] sm:$0xf]
        %v222 = vld [vmem:[%s1 + $0x2c] sm:$0xf]
        %v223 = vld [vmem:[%s1 + $0x30] sm:$0xf]
        %v224 = vld [vmem:[%s1 + $0x34] sm:$0xf]
        %v225 = vld [vmem:[%s1 + $0x38] sm:$0xf]
        %v226 = vld [vmem:[%s1 + $0x3c] sm:$0xf]
        %v243 = vunpack.c.l.b16 %v211
        %v244 = vunpack.c.l.b16 %v212
        %v245 = vunpack.c.l.b16 %v213
        %v246 = vunpack.c.l.b16 %v214
        %v247 = vunpack.c.l.b16 %v215
        %v248 = vunpack.c.l.b16 %v216
        %v249 = vunpack.c.l.b16 %v217
        %v250 = vunpack.c.l.b16 %v218
        %v251 = vunpack.c.l.b16 %v219
        %v252 = vunpack.c.l.b16 %v220
        %v253 = vunpack.c.l.b16 %v221
        %v254 = vunpack.c.l.b16 %v222
        %v255 = vunpack.c.l.b16 %v223
        %v256 = vunpack.c.l.b16 %v224
        %v257 = vunpack.c.l.b16 %v225
        %v258 = vunpack.c.l.b16 %v226
        %v259 = vpack.c.b16 %v244, %v243
        %v260 = vpack.c.b16 %v246, %v245
        %v261 = vpack.c.b16 %v248, %v247
        %v262 = vpack.c.b16 %v250, %v249
        %v263 = vpack.c.b16 %v252, %v251
        %v264 = vpack.c.b16 %v254, %v253
        %v265 = vpack.c.b16 %v256, %v255
        %v266 = vpack.c.b16 %v258, %v257
        %275 = vmatpush.bf16.msra.mxu0 %v266
        %276 = vmatpush.bf16.msra.mxu0 %v265
        %277 = vmatpush.bf16.msra.mxu0 %v264
        %278 = vmatpush.bf16.msra.mxu0 %v263
        %279 = vmatpush.bf16.msra.mxu0 %v262
        %280 = vmatpush.bf16.msra.mxu0 %v261
        %281 = vmatpush.bf16.msra.mxu0 %v260
        %282 = vmatpush.bf16.msra.mxu0 %v259
        %283 = vmatmul.bf16.gmra.mxu0 %v210
        %v284 = vpop.f32.mrf.mxu0
        %v285 = vadd.f32 0.0, %v284
        %v286 = vpop.f32.mrf.mxu0
        %287 = vdwg.mxu0
        %v288 = vmul.f32 %v285, 2.0
        %v289 = vld [vmem:[%s209] sm:$0xff]
        %v290 = vld [vmem:[%s3] sm:$0x1]
        %291 = vset.pattern.permute.xlu0 0
        %292 = vperm.xlu0 %291, %v289
        %v293 = vpop.permute.xlu0 %292
        %v294 = vperm.slane %v290, 0
        %vm295 = vcmp.eq.s32.totalorder %v293, %v294
        %vm296 = vcmp.ne.s32.totalorder %v289, 4294967295
        %v297 = vsel %vm296, 1, 0
        %298 = vset.pattern.permute.xlu0 0
        %299 = vperm.xlu0 %298, %v297
        %v300 = vpop.permute.xlu0 %299
        %vm301 = vcmp.eq.s32.totalorder %v300, 1
        %vm302 = vmand %vm295, %vm301
        %v303 = vsel %vm302, -inf, %v288
        %v304 = vmul.f32 %v303, 1.442695
        %v305 = vpow.pop %v304
        %s306 = smul.u32 %s18, 8
        %v307 = vlaneseq
        %v308 = vshrl.u32 %v307, 7
        %v309 = vstv %s306
        %v310 = vadd.s32 %v309, %v308
        %vm311 = vcmp.lt.s32.totalorder %v310, 0
        %v312 = vsub.s32 0, %v310
        %v313 = vsel %vm311, %v312, %v310
        %v314 = vshrl.u32 %v313, 3
        %v315 = vand.u32 %v313, 7
        %v316 = vsub.s32 0, %v315
        %v317 = vsel %vm311, %v316, %v315
        %vm318 = vcmp.ne.s32.totalorder %v317, 0
        %vm319 = vcmp.lt.s32.totalorder %v317, 0
        %vm320 = vmand %vm319, %vm318
        %v321 = vadd.s32 %v317, 8
        %v322 = vsel %vm320, %v321, %v317
        %v323 = vadd.s32 %v322, 7
        %v324 = vlaneseq
        %v325 = vand.u32 %v324, 127
        %vm326 = vcmp.lt.s32.totalorder %v325, %v322
        %vm327 = vcmp.lt.s32.totalorder %v325, %v323
        %329 = vrot.lane.b32.xlu0 %v305, 127
        %v330 = vpop.permute.xlu0 %329
        %332 = vrot.lane.b32.xlu0 %v305, 126
        %v333 = vpop.permute.xlu0 %332
        %v335 = vsel %vm327, %v330, %v333
        %v336 = vsel %vm326, %v305, %v335
        %vm337 = vcmask 64512
        %338 = vst.msk [vmem:[%s201] sm:$0xff] %vm337, %v336
        %v339 = vadd.s32 %v325, 8
        %vm340 = vcmp.lt.s32.totalorder %v339, %v322
        %vm341 = vcmp.lt.s32.totalorder %v339, %v323
        %342 = vrot.lane.b32.xlu0 %v305, 119
        %v343 = vpop.permute.xlu0 %342
        %345 = vrot.lane.b32.xlu0 %v305, 118
        %v346 = vpop.permute.xlu0 %345
        %v348 = vsel %vm341, %v343, %v346
        %349 = vrot.lane.b32.xlu0 %v305, 120
        %v350 = vpop.permute.xlu0 %349
        %v352 = vsel %vm340, %v350, %v348
        %354 = vrot.lane.b32.xlu0 %v352, 8
        %v355 = vpop.permute.xlu0 %354
        %vm357 = vcmask 113728
        %358 = vst.msk [vmem:[%s201] sm:$0xff] %vm357, %v355
        %s359 = sand.u32 %s120, 1
        %s360 = scalar_lea.sflag [#allocation3], %s359
        %s361 = sand.u32 %s120, 1
        %s362 = smul.addr %s361, 8
        %s363 = scalar_lea.vmem [#allocation2], %s362
        // Predicated region
        $region37: #{tpu_custom_call.1} parent=35 // pred_check
          %p364 = pneg %p130
        $region38: #{tpu_custom_call.1} parent=35 // pred_check_branch
          %366 = sbr.rel (%p364) target = $region40
        $region39: #{tpu_custom_call.1} parent=35 // pred_region
          %368 = vsyncadd %s360, 0
          %s369 = smul.addr %s18, 8
          %s370 = scalar_lea.hbm %s4, %s369
          %s372 = sshll.u32 %s363, 4
          %s373 = int_to_ptr.vmem [resolvable:$true] %s372
          %s374 = sshll.u32 %s370, 4
          %s375 = int_to_ptr.hbm [resolvable:$true] %s374
          %377 = dma.vmem_to_hbm [thread:$0]  %s373, 128, %s375, %s360
        $region40: #{tpu_custom_call.1} parent=35 // pred_fallthru
          _
      $region36: #{tpu_custom_call.1} parent=5 // pred_fallthru
        _
      %p378 = scmp.le.s32.totalorder 2, %s13
      // Predicated region
      $region41: #{tpu_custom_call.1} parent=5 // pred_check
        %p379 = pneg %p378
      $region42: #{tpu_custom_call.1} parent=5 // pred_check_branch
        %381 = sbr.rel (%p379) target = $region44
      $region43: #{tpu_custom_call.1} parent=5 // pred_region
        %s382 = ssub.s32 %s13, 2
        // Predicated region
        $region45: #{tpu_custom_call.1} parent=43 // pred_check
          %p383 = pneg %p136
        $region46: #{tpu_custom_call.1} parent=43 // pred_check_branch
          %385 = sbr.rel (%p383) target = $region48
        $region47: #{tpu_custom_call.1} parent=43 // pred_region
          %s386 = sand.u32 %s121, 1
          %s387 = scalar_lea.sflag [#allocation3], %s386
          %s388 = sand.u32 %s121, 1
          %s389 = smul.addr %s388, 8
          %s390 = scalar_lea.vmem [#allocation2], %s389
          %392 = dma.done %s387, 128
        $region48: #{tpu_custom_call.1} parent=43 // pred_fallthru
          _
      $region44: #{tpu_custom_call.1} parent=5 // pred_fallthru
        _
    $region6: #{tpu_custom_call.1} parent=1 // loop_footer
      %s17 = sadd.s32 1, %s13
    $region7: #{tpu_custom_call.1} parent=1 // loop_footer_branch
      %12 = sbr.rel target = $region3
    $region8: #{tpu_custom_call.1} parent=1 // loop_exit
      _
    %393 = vsyncpa [#allocation3], 1
    %s394 = scalar_lea.sflag [#allocation3], 1
    %395 = vsyncpa %s394, 1

</llo_original>
